<compile_context>
chip_gen: v6e
topology: v6e:2x2x1
jax: 0.10.0
libtpu: 0.0.40
codegen_flags: <defaults>
</compile_context>

<pallas_src>
import jax
import jax.numpy as jnp
from jax.experimental import pallas as pl
from jax.experimental.pallas import tpu as pltpu


def _laplacian_kernel(x_ref, o_ref):
    """One grid step: P planes. (P, H, W) float32 in -> (P, H, W) uint8 out."""
    x = x_ref[...]                                        # (P, H, W) float32
    _, H, W = x.shape

    # --- quantize: src*255, clamp to [0, 255], uint8 truncation (kept in f32) ---
    u = jnp.floor(jnp.clip(x * 255.0, 0.0, 255.0))

    # --- reflect-101 row halo of 2 px (sublane-dim concat, cheap) ---
    # padded rows: [u[2], u[1], u[0..H-1], u[H-2], u[H-3]]
    up = jnp.concatenate(
        [u[:, 2:3, :], u[:, 1:2, :], u,
         u[:, H - 2:H - 1, :], u[:, H - 3:H - 2, :]], axis=1)      # (P, H+4, W)

    # --- vertical [1,2,1]/4 Gaussian pass ---
    v = (up[:, 0:H + 2, :] + 2.0 * up[:, 1:H + 3, :] + up[:, 2:H + 4, :]) * 0.25

    # --- reflect-101 column halo of 2 px on the vertically-blurred field ---
    # (valid because the vertical pass does not mix columns)
    vp = jnp.concatenate(
        [v[:, :, 2:3], v[:, :, 1:2], v,
         v[:, :, W - 2:W - 1], v[:, :, W - 3:W - 2]], axis=2)      # (P, H+2, W+4)

    # --- horizontal [1,2,1]/4 pass + single round-half-up (OpenCV 8-bit path) ---
    b = (vp[:, :, 0:W + 2] + 2.0 * vp[:, :, 1:W + 3] + vp[:, :, 2:W + 4]) * 0.25
    b = jnp.floor(b + 0.5)                                # (P, H+2, W+2) in [0,255]

    # --- Laplacian ksize=3: [[2,0,2],[0,-8,0],[2,0,2]], CV_16S (no overflow) ---
    corners = (b[:, 0:H, 0:W] + b[:, 0:H, 2:W + 2]
               + b[:, 2:H + 2, 0:W] + b[:, 2:H + 2, 2:W + 2])
    lap = 2.0 * corners - 8.0 * b[:, 1:H + 1, 1:W + 1]    # |lap| <= 2040

    # --- convertScaleAbs: |x| saturated to uint8, emitted as uint8 directly ---
    out = jnp.minimum(jnp.abs(lap), 255.0)                # integer-valued in [0,255]
    o_ref[...] = out.astype(jnp.int32).astype(jnp.uint8)  # robust 2-step cast


def _planes_per_step(n_planes, h, w, budget_bytes=1 * 1024 * 1024):
    """Largest divisor P of n_planes whose f32 tile fits the budget (grid >= 2 if possible)."""
    plane_bytes = h * w * 4
    best = 1
    for p in range(1, n_planes + 1):
        if n_planes % p != 0:
            continue
        if p > 1 and p * plane_bytes > budget_bytes:
            continue
        if n_planes >= 2 and n_planes // p < 2:
            continue
        best = p
    return best


def laplacian_forward(x, kernel_size=3):
    """x: (B, C, H, W) float array (NCHW). Returns uint8 (B, C, H, W)."""
    assert kernel_size == 3, "only kernel_size=3 implemented"
    B, C, H, W = x.shape
    assert H >= 3 and W >= 3, "reflect-101 halo of 2 needs H, W >= 3"
    N = B * C

    xf = jnp.asarray(x, jnp.float32).reshape(N, H, W)     # free reshape, no pad pass

    P = _planes_per_step(N, H, W)
    grid = (N // P,)

    out = pl.pallas_call(
        _laplacian_kernel,
        out_shape=jax.ShapeDtypeStruct((N, H, W), jnp.uint8),
        grid=grid,
        in_specs=[pl.BlockSpec((P, H, W), lambda i: (i, 0, 0))],
        out_specs=pl.BlockSpec((P, H, W), lambda i: (i, 0, 0)),
        compiler_params=pltpu.CompilerParams(
            dimension_semantics=("parallel",),
            vmem_limit_bytes=48 * 1024 * 1024),
    )(xf)

    return out.reshape(B, C, H, W)


if __name__ == "__main__":
    key = jax.random.PRNGKey(0)
    B, C, H, W = 2, 4, 16, 16
    # values roughly in [-0.1, 1.1] so both clamps are exercised
    x = jax.random.uniform(key, (B, C, H, W), jnp.float32,
                           minval=-0.1, maxval=1.1)

    y = laplacian_forward(x, kernel_size=3)
    y = jax.block_until_ready(y)

    assert y.shape == (B, C, H, W)
    assert y.dtype == jnp.uint8
    print("KERNEL_OK")
</pallas_src>

<mosaic_0001>
module attributes {stable_mosaic.version = 11 : i64} {
  func.func @_laplacian_kernel(%arg0: i32, %arg1: memref<4x16x16xf32, #tpu.memory_space<vmem>>, %arg2: memref<4x16x16xi8, #tpu.memory_space<vmem>>) attributes {dimension_semantics = [#tpu.dimension_semantics<parallel>], iteration_bounds = array<i64: 2>, scalar_prefetch = 0 : i64, scratch_operands = 0 : i64, tpu.core_type = #tpu.core_type<tc>, window_params = [{transform_indices = @transform_0, window_bounds = array<i64: 4, 16, 16>}, {transform_indices = @transform_1, window_bounds = array<i64: 4, 16, 16>}]} {
    %c0 = arith.constant 0 : index
    %c0_0 = arith.constant 0 : index
    %c0_1 = arith.constant 0 : index
    %0 = vector.load %arg1[%c0, %c0_0, %c0_1] : memref<4x16x16xf32, #tpu.memory_space<vmem>>, vector<4x16x16xf32>
    %cst = arith.constant 2.550000e+02 : f32
    %1 = vector.broadcast %cst : f32 to vector<4x16x16xf32>
    %2 = arith.mulf %0, %1 : vector<4x16x16xf32>
    %cst_2 = arith.constant 0.000000e+00 : f32
    %cst_3 = arith.constant 2.550000e+02 : f32
    %3 = vector.broadcast %cst_2 : f32 to vector<4x16x16xf32>
    %4 = arith.maximumf %3, %2 : vector<4x16x16xf32>
    %5 = vector.broadcast %cst_3 : f32 to vector<4x16x16xf32>
    %6 = arith.minimumf %5, %4 : vector<4x16x16xf32>
    %7 = math.floor %6 : vector<4x16x16xf32>
    %8 = vector.extract_strided_slice %7 {offsets = [0, 2, 0], sizes = [4, 1, 16], strides = [1, 1, 1]} : vector<4x16x16xf32> to vector<4x1x16xf32>
    %9 = vector.extract_strided_slice %7 {offsets = [0, 1, 0], sizes = [4, 1, 16], strides = [1, 1, 1]} : vector<4x16x16xf32> to vector<4x1x16xf32>
    %10 = vector.extract_strided_slice %7 {offsets = [0, 14, 0], sizes = [4, 1, 16], strides = [1, 1, 1]} : vector<4x16x16xf32> to vector<4x1x16xf32>
    %11 = vector.extract_strided_slice %7 {offsets = [0, 13, 0], sizes = [4, 1, 16], strides = [1, 1, 1]} : vector<4x16x16xf32> to vector<4x1x16xf32>
    %12 = tpu.concatenate %8, %9, %7, %10, %11 in 1 : vector<4x1x16xf32>, vector<4x1x16xf32>, vector<4x16x16xf32>, vector<4x1x16xf32>, vector<4x1x16xf32> -> vector<4x20x16xf32>
    %13 = vector.extract_strided_slice %12 {offsets = [0, 0, 0], sizes = [4, 18, 16], strides = [1, 1, 1]} : vector<4x20x16xf32> to vector<4x18x16xf32>
    %14 = vector.extract_strided_slice %12 {offsets = [0, 1, 0], sizes = [4, 18, 16], strides = [1, 1, 1]} : vector<4x20x16xf32> to vector<4x18x16xf32>
    %cst_4 = arith.constant 2.000000e+00 : f32
    %15 = vector.broadcast %cst_4 : f32 to vector<4x18x16xf32>
    %16 = arith.mulf %15, %14 : vector<4x18x16xf32>
    %17 = arith.addf %13, %16 : vector<4x18x16xf32>
    %18 = vector.extract_strided_slice %12 {offsets = [0, 2, 0], sizes = [4, 18, 16], strides = [1, 1, 1]} : vector<4x20x16xf32> to vector<4x18x16xf32>
    %19 = arith.addf %17, %18 : vector<4x18x16xf32>
    %cst_5 = arith.constant 2.500000e-01 : f32
    %20 = vector.broadcast %cst_5 : f32 to vector<4x18x16xf32>
    %21 = arith.mulf %19, %20 : vector<4x18x16xf32>
    %22 = vector.extract_strided_slice %21 {offsets = [0, 0, 2], sizes = [4, 18, 1], strides = [1, 1, 1]} : vector<4x18x16xf32> to vector<4x18x1xf32>
    %23 = vector.extract_strided_slice %21 {offsets = [0, 0, 1], sizes = [4, 18, 1], strides = [1, 1, 1]} : vector<4x18x16xf32> to vector<4x18x1xf32>
    %24 = vector.extract_strided_slice %21 {offsets = [0, 0, 14], sizes = [4, 18, 1], strides = [1, 1, 1]} : vector<4x18x16xf32> to vector<4x18x1xf32>
    %25 = vector.extract_strided_slice %21 {offsets = [0, 0, 13], sizes = [4, 18, 1], strides = [1, 1, 1]} : vector<4x18x16xf32> to vector<4x18x1xf32>
    %26 = tpu.concatenate %22, %23, %21, %24, %25 in 2 : vector<4x18x1xf32>, vector<4x18x1xf32>, vector<4x18x16xf32>, vector<4x18x1xf32>, vector<4x18x1xf32> -> vector<4x18x20xf32>
    %27 = vector.extract_strided_slice %26 {offsets = [0, 0, 0], sizes = [4, 18, 18], strides = [1, 1, 1]} : vector<4x18x20xf32> to vector<4x18x18xf32>
    %28 = vector.extract_strided_slice %26 {offsets = [0, 0, 1], sizes = [4, 18, 18], strides = [1, 1, 1]} : vector<4x18x20xf32> to vector<4x18x18xf32>
    %cst_6 = arith.constant 2.000000e+00 : f32
    %29 = vector.broadcast %cst_6 : f32 to vector<4x18x18xf32>
    %30 = arith.mulf %29, %28 : vector<4x18x18xf32>
    %31 = arith.addf %27, %30 : vector<4x18x18xf32>
    %32 = vector.extract_strided_slice %26 {offsets = [0, 0, 2], sizes = [4, 18, 18], strides = [1, 1, 1]} : vector<4x18x20xf32> to vector<4x18x18xf32>
    %33 = arith.addf %31, %32 : vector<4x18x18xf32>
    %cst_7 = arith.constant 2.500000e-01 : f32
    %34 = vector.broadcast %cst_7 : f32 to vector<4x18x18xf32>
    %35 = arith.mulf %33, %34 : vector<4x18x18xf32>
    %cst_8 = arith.constant 5.000000e-01 : f32
    %36 = vector.broadcast %cst_8 : f32 to vector<4x18x18xf32>
    %37 = arith.addf %35, %36 : vector<4x18x18xf32>
    %38 = math.floor %37 : vector<4x18x18xf32>
    %39 = vector.extract_strided_slice %38 {offsets = [0, 0, 0], sizes = [4, 16, 16], strides = [1, 1, 1]} : vector<4x18x18xf32> to vector<4x16x16xf32>
    %40 = vector.extract_strided_slice %38 {offsets = [0, 0, 2], sizes = [4, 16, 16], strides = [1, 1, 1]} : vector<4x18x18xf32> to vector<4x16x16xf32>
    %41 = arith.addf %39, %40 : vector<4x16x16xf32>
    %42 = vector.extract_strided_slice %38 {offsets = [0, 2, 0], sizes = [4, 16, 16], strides = [1, 1, 1]} : vector<4x18x18xf32> to vector<4x16x16xf32>
    %43 = arith.addf %41, %42 : vector<4x16x16xf32>
    %44 = vector.extract_strided_slice %38 {offsets = [0, 2, 2], sizes = [4, 16, 16], strides = [1, 1, 1]} : vector<4x18x18xf32> to vector<4x16x16xf32>
    %45 = arith.addf %43, %44 : vector<4x16x16xf32>
    %cst_9 = arith.constant 2.000000e+00 : f32
    %46 = vector.broadcast %cst_9 : f32 to vector<4x16x16xf32>
    %47 = arith.mulf %46, %45 : vector<4x16x16xf32>
    %48 = vector.extract_strided_slice %38 {offsets = [0, 1, 1], sizes = [4, 16, 16], strides = [1, 1, 1]} : vector<4x18x18xf32> to vector<4x16x16xf32>
    %cst_10 = arith.constant 8.000000e+00 : f32
    %49 = vector.broadcast %cst_10 : f32 to vector<4x16x16xf32>
    %50 = arith.mulf %49, %48 : vector<4x16x16xf32>
    %51 = arith.subf %47, %50 : vector<4x16x16xf32>
    %52 = math.absf %51 : vector<4x16x16xf32>
    %cst_11 = arith.constant 2.550000e+02 : f32
    %53 = vector.broadcast %cst_11 : f32 to vector<4x16x16xf32>
    %54 = arith.minimumf %52, %53 : vector<4x16x16xf32>
    %55 = arith.fptosi %54 : vector<4x16x16xf32> to vector<4x16x16xi32>
    %56 = arith.trunci %55 : vector<4x16x16xi32> to vector<4x16x16xi8>
    %c0_12 = arith.constant 0 : index
    %c0_13 = arith.constant 0 : index
    %c0_14 = arith.constant 0 : index
    %57 = vector.load %arg2[%c0_12, %c0_13, %c0_14] : memref<4x16x16xi8, #tpu.memory_space<vmem>>, vector<4x16x16xi8>
    tpu.vector_store %arg2[%c0_12, %c0_13, %c0_14], %56 {strides = array<i32>} : memref<4x16x16xi8, #tpu.memory_space<vmem>>, vector<4x16x16xi8>,
    return
  }
  func.func @transform_0(%arg0: i32) -> (i32, i32, i32) {
    %c0_i32 = arith.constant 0 : i32
    %c0_i32_0 = arith.constant 0 : i32
    %c0_i32_1 = arith.constant 0 : i32
    return %arg0, %c0_i32, %c0_i32_0 : i32, i32, i32
  }
  func.func @transform_1(%arg0: i32) -> (i32, i32, i32) {
    %c0_i32 = arith.constant 0 : i32
    %c0_i32_0 = arith.constant 0 : i32
    %c0_i32_1 = arith.constant 0 : i32
    return %arg0, %c0_i32, %c0_i32_0 : i32, i32, i32
  }
}

</mosaic_0001>

<llo_original>
// kernel: tpu_custom_call.1
$region0: #{tpu_custom_call.1}
  #allocation0 [shape = 'u32[]', space=smem, size = 0x4, offset = 0x4, fixed_abs, tag = 'smem constant byte address 0x4 - core index']
  #allocation1 [shape = 'u32[144,128]{1,0:T(1,128)}', space=vmem, size = 0x12000, scoped, tag = 'internal scratch']
  %s0 = inlined_call_operand.hbm [shape: f32[8,16,16], index: 0, kind: input, shape index: {}]
  %s1 = inlined_call_operand.hbm [shape: u8[8,16,16], index: 1, kind: output, shape index: {}]
  %s2 = sld [smem:[#allocation0]]
  $region41: #{tpu_custom_call.1} parent=0
    _
  %s4 = ssub.s32 1, %s2
  %s5 = scalar_select 0, %s4, %s2
  $region1: #{tpu_custom_call.1} parent=0
    #allocation2 [shape = 'u8[65536]{0}', space=vmem, size = 0x10000, scoped, tag = 'input window, operand 0']
    #allocation3 [shape = 's32[2]{0}', space=sflag, size = 0x8, scoped, tag = 'scoped memory for tpu_custom_call.1']
    #allocation4 [shape = 's32[2]{0}', space=sflag, size = 0x8, scoped, tag = 'scoped memory for tpu_custom_call.1']
    #allocation5 [shape = 'u8[16384]{0}', space=vmem, size = 0x4000, scoped, tag = 'output window, operand 0']
    %6 = vsyncpa [#allocation3], 0
    %s7 = scalar_lea.sflag [#allocation3], 1
    %8 = vsyncpa %s7, 0
    %9 = vsyncpa [#allocation4], 0
    %s10 = scalar_lea.sflag [#allocation4], 1
    %11 = vsyncpa %s10, 0
    loop: start=0, step=1, limit=4
    $region2: #{tpu_custom_call.1} parent=1 // loop_pre_header
      _
    $region3: #{tpu_custom_call.1} parent=1 // loop_header
      %s13 = sphi 0, %s17
      %p14 = scmp.ge.s32.totalorder %s13, 4
      %s23 = sphi 0, %s25
      %s26 = sphi 0, %s23
      %s27 = sphi 0, %s26
      %s43 = sphi 0, %s27
      %s49 = sphi 0, %s51
      %s52 = sphi 0, %s49
      %s53 = sphi 0, %s52
      %s69 = sphi 0, %s53
    $region4: #{tpu_custom_call.1} parent=1 // loop_header_branch
      %16 = sbr.rel (%p14) target = $region8
    $region5: #{tpu_custom_call.1} parent=1 // loop_body
      %s18 = ssub.s32 %s13, 1
      %s19 = ssub.s32 %s13, 2
      %s20 = sadd.s32 %s13, 1
      %s21 = ssub.s32 %s13, %s20
      %p22 = scmp.eq.s32.totalorder %s21, 0
      %s24 = sadd.s32 %s23, 1
      %s25 = scalar_select %p22, %s23, %s24
      %p28 = pneg %p22
      %p29 = scmp.eq.s32.totalorder %s13, 1
      %p30 = por %p28, %p29
      %p31 = scmp.ne.s32.totalorder %s23, %s26
      %p32 = scmp.eq.s32.totalorder %s13, 0
      %p33 = por %p31, %p32
      %p34 = scmp.ne.s32.totalorder %s23, %s26
      %p35 = scmp.eq.s32.totalorder %s18, 1
      %p36 = por %p34, %p35
      %p37 = scmp.ne.s32.totalorder %s26, %s27
      %p38 = scmp.eq.s32.totalorder %s18, 0
      %p39 = por %p37, %p38
      %p40 = scmp.ne.s32.totalorder %s26, %s27
      %p41 = scmp.eq.s32.totalorder %s19, 1
      %p42 = por %p40, %p41
      %p44 = scmp.ne.s32.totalorder %s27, %s43
      %p45 = scmp.eq.s32.totalorder %s19, 0
      %p46 = por %p44, %p45
      %s47 = ssub.s32 %s13, %s20
      %p48 = scmp.eq.s32.totalorder %s47, 0
      %s50 = sadd.s32 %s49, 1
      %s51 = scalar_select %p48, %s49, %s50
      %p54 = pneg %p48
      %p55 = scmp.eq.s32.totalorder %s13, 1
      %p56 = por %p54, %p55
      %p57 = scmp.ne.s32.totalorder %s49, %s52
      %p58 = scmp.eq.s32.totalorder %s13, 0
      %p59 = por %p57, %p58
      %p60 = scmp.ne.s32.totalorder %s49, %s52
      %p61 = scmp.eq.s32.totalorder %s18, 1
      %p62 = por %p60, %p61
      %p63 = scmp.ne.s32.totalorder %s52, %s53
      %p64 = scmp.eq.s32.totalorder %s18, 0
      %p65 = por %p63, %p64
      %p66 = scmp.ne.s32.totalorder %s52, %s53
      %p67 = scmp.eq.s32.totalorder %s19, 1
      %p68 = por %p66, %p67
      %p70 = scmp.ne.s32.totalorder %s53, %s69
      %p71 = scmp.eq.s32.totalorder %s19, 0
      %p72 = por %p70, %p71
      %p73 = scmp.le.s32.totalorder 1, %s13
      %p74 = scmp.lt.s32.totalorder %s13, 3
      %p75 = pnand %p73, %p74
      %p76 = pneg %p75
      // Predicated region
      $region9: #{tpu_custom_call.1} parent=5 // pred_check
        _
      $region10: #{tpu_custom_call.1} parent=5 // pred_check_branch
        %78 = sbr.rel (%p75) target = $region12
      $region11: #{tpu_custom_call.1} parent=5 // pred_region
        %s79 = ssub.s32 %s13, 1
      $region12: #{tpu_custom_call.1} parent=5 // pred_fallthru
        _
      %p80 = scmp.lt.s32.totalorder %s13, 2
      // Predicated region
      $region13: #{tpu_custom_call.1} parent=5 // pred_check
        %p81 = pneg %p80
      $region14: #{tpu_custom_call.1} parent=5 // pred_check_branch
        %83 = sbr.rel (%p81) target = $region16
      $region15: #{tpu_custom_call.1} parent=5 // pred_region
        // Predicated region
        $region17: #{tpu_custom_call.1} parent=15 // pred_check
          %p84 = pneg %p33
        $region18: #{tpu_custom_call.1} parent=15 // pred_check_branch
          %86 = sbr.rel (%p84) target = $region20
        $region19: #{tpu_custom_call.1} parent=15 // pred_region
          %s87 = sand.u32 %s23, 1
          %s88 = scalar_lea.sflag [#allocation3], %s87
          %s89 = sand.u32 %s23, 1
          %s90 = smul.addr %s89, 64
          %s91 = scalar_lea.vmem [#allocation2], %s90
          %s92 = smul.u32 4, %s13
          %s94 = ssub.s32 1024, 1024
          %95 = vsyncadd %s88, %s94
          %s96 = smul.addr %s92, 2
          %s97 = smul.addr %s96, 128
          %s98 = scalar_lea.hbm %s0, %s97
          %s99 = sshll.u32 %s91, 4
          %s100 = int_to_ptr.vmem [resolvable:$true] %s99
          %105 = dma.hbm_to_vmem [thread:$0]  %s98, 1024, %s100, %s88, 128, 128, 8
        $region20: #{tpu_custom_call.1} parent=15 // pred_fallthru
          _
      $region16: #{tpu_custom_call.1} parent=5 // pred_fallthru
        _
      %p106 = scmp.le.s32.totalorder 1, %s13
      %p107 = scmp.lt.s32.totalorder %s13, 3
      %p108 = pnand %p106, %p107
      %p109 = pneg %p108
      // Predicated region
      $region21: #{tpu_custom_call.1} parent=5 // pred_check
        _
      $region22: #{tpu_custom_call.1} parent=5 // pred_check_branch
        %111 = sbr.rel (%p108) target = $region24
      $region23: #{tpu_custom_call.1} parent=5 // pred_region
        %s112 = ssub.s32 %s13, 1
        %s113 = sand.u32 %s26, 1
        %s114 = scalar_lea.sflag [#allocation3], %s113
        %s115 = sand.u32 %s26, 1
        %s116 = smul.addr %s115, 64
        %s117 = scalar_lea.vmem [#allocation2], %s116
        // Predicated region
        $region25: #{tpu_custom_call.1} parent=23 // pred_check
          %p118 = pneg %p39
        $region26: #{tpu_custom_call.1} parent=23 // pred_check_branch
          %120 = sbr.rel (%p118) target = $region28
        $region27: #{tpu_custom_call.1} parent=23 // pred_region
          %121 = dma.done %s114, 1024
        $region28: #{tpu_custom_call.1} parent=23 // pred_fallthru
          _
        %s122 = sand.u32 %s26, 1
        %s123 = scalar_lea.sflag [#allocation3], %s122
        %s124 = sand.u32 %s26, 1
        %s125 = smul.addr %s124, 64
        %s126 = scalar_lea.vmem [#allocation2], %s125
        %p127 = pneg %p39
        %p128 = pneg %p36
        %p129 = pneg %p65
        %p130 = pneg %p62
        %s131 = sand.u32 %s52, 1
        %s132 = scalar_lea.sflag [#allocation4], %s131
        %s133 = sand.u32 %s52, 1
        %s134 = smul.addr %s133, 16
        %s135 = scalar_lea.vmem [#allocation5], %s134
        %s136 = smul.u32 4, %s18
        %s137 = smul.u32 4, %s18
        %v138 = vld [vmem:[%s117] sm:$0xff]
        %v139 = vld [vmem:[%s117 + $0x8] sm:$0xff]
        %v140 = vld [vmem:[%s117 + $0x10] sm:$0xff]
        %v141 = vld [vmem:[%s117 + $0x18] sm:$0xff]
        %v142 = vld [vmem:[%s117 + $0x20] sm:$0xff]
        %v143 = vld [vmem:[%s117 + $0x28] sm:$0xff]
        %v144 = vld [vmem:[%s117 + $0x30] sm:$0xff]
        %v145 = vld [vmem:[%s117 + $0x38] sm:$0xff]
        %v146 = vmul.f32 %v138, 255.0
        %v147 = vmul.f32 %v139, 255.0
        %v148 = vmul.f32 %v140, 255.0
        %v149 = vmul.f32 %v141, 255.0
        %v150 = vmul.f32 %v142, 255.0
        %v151 = vmul.f32 %v143, 255.0
        %v152 = vmul.f32 %v144, 255.0
        %v153 = vmul.f32 %v145, 255.0
        %v154 = vmax.f32 %v146, 0.0
        %v155 = vmax.f32 %v147, 0.0
        %v156 = vmax.f32 %v148, 0.0
        %v157 = vmax.f32 %v149, 0.0
        %v158 = vmax.f32 %v150, 0.0
        %v159 = vmax.f32 %v151, 0.0
        %v160 = vmax.f32 %v152, 0.0
        %v161 = vmax.f32 %v153, 0.0
        %v162 = vmin.f32 %v154, 255.0
        %v163 = vmin.f32 %v155, 255.0
        %v164 = vmin.f32 %v156, 255.0
        %v165 = vmin.f32 %v157, 255.0
        %v166 = vmin.f32 %v158, 255.0
        %v167 = vmin.f32 %v159, 255.0
        %v168 = vmin.f32 %v160, 255.0
        %v169 = vmin.f32 %v161, 255.0
        %v170 = vfloor.f32 %v162
        %v171 = vfloor.f32 %v163
        %v172 = vfloor.f32 %v164
        %v173 = vfloor.f32 %v165
        %v174 = vfloor.f32 %v166
        %v175 = vfloor.f32 %v167
        %v176 = vfloor.f32 %v168
        %v177 = vfloor.f32 %v169
        %v182 = vrot.slane %v170, 2
        %v183 = vrot.slane %v172, 2
        %v184 = vrot.slane %v174, 2
        %v185 = vrot.slane %v176, 2
        %vm194 = vcmask 1041408
        %v195 = vrot.slane %v170, 6
        %v196 = vrot.slane %v171, 6
        %v197 = vsel %vm194, %v195, %v196
        %v198 = vrot.slane %v172, 6
        %v199 = vrot.slane %v173, 6
        %v200 = vsel %vm194, %v198, %v199
        %v201 = vrot.slane %v174, 6
        %v202 = vrot.slane %v175, 6
        %v203 = vsel %vm194, %v201, %v202
        %v204 = vrot.slane %v176, 6
        %v205 = vrot.slane %v177, 6
        %v206 = vsel %vm194, %v204, %v205
        %v219 = vrot.slane %v171, 4
        %v220 = vrot.slane %v173, 4
        %v221 = vrot.slane %v175, 4
        %v222 = vrot.slane %v177, 4
        %v227 = vrot.slane %v171, 2
        %v228 = vrot.slane %v173, 2
        %v229 = vrot.slane %v175, 2
        %v230 = vrot.slane %v177, 2
        %vm235 = vcmask 1040384
        %v236 = vsel %vm235, %v182, %v170
        %v237 = vsel %vm235, %v183, %v172
        %v238 = vsel %vm235, %v184, %v174
        %v239 = vsel %vm235, %v185, %v176
        %v240 = vsel %vm194, %v236, %v195
        %v241 = vsel %vm194, %v237, %v198
        %v242 = vsel %vm194, %v238, %v201
        %v243 = vsel %vm194, %v239, %v204
        %v244 = vsel %vm194, %v196, %v219
        %v245 = vsel %vm194, %v199, %v220
        %v246 = vsel %vm194, %v202, %v221
        %v247 = vsel %vm194, %v205, %v222
        %vm248 = vcmask 1042432
        %v249 = vsel %vm248, %v244, %v227
        %v250 = vsel %vm248, %v245, %v228
        %v251 = vsel %vm248, %v246, %v229
        %v252 = vsel %vm248, %v247, %v230
        %v253 = vmul.f32 %v240, 2.0
        %v254 = vmul.f32 %v197, 2.0
        %v255 = vmul.f32 %v249, 2.0
        %v256 = vmul.f32 %v241, 2.0
        %v257 = vmul.f32 %v200, 2.0
        %v258 = vmul.f32 %v250, 2.0
        %v259 = vmul.f32 %v242, 2.0
        %v260 = vmul.f32 %v203, 2.0
        %v261 = vmul.f32 %v251, 2.0
        %v262 = vmul.f32 %v243, 2.0
        %v263 = vmul.f32 %v206, 2.0
        %v264 = vmul.f32 %v252, 2.0
        %vm277 = vcmask 1046528
        %v278 = vrot.slane %v253, 1
        %v279 = vrot.slane %v254, 1
        %v280 = vsel %vm277, %v278, %v279
        %v281 = vrot.slane %v255, 1
        %v282 = vsel %vm277, %v279, %v281
        %v283 = vrot.slane %v256, 1
        %v284 = vrot.slane %v257, 1
        %v285 = vsel %vm277, %v283, %v284
        %v286 = vrot.slane %v258, 1
        %v287 = vsel %vm277, %v284, %v286
        %v288 = vrot.slane %v259, 1
        %v289 = vrot.slane %v260, 1
        %v290 = vsel %vm277, %v288, %v289
        %v291 = vrot.slane %v261, 1
        %v292 = vsel %vm277, %v289, %v291
        %v293 = vrot.slane %v262, 1
        %v294 = vrot.slane %v263, 1
        %v295 = vsel %vm277, %v293, %v294
        %v296 = vrot.slane %v264, 1
        %v297 = vsel %vm277, %v294, %v296
        %v310 = vadd.f32 %v240, %v280
        %v311 = vadd.f32 %v197, %v282
        %v312 = vadd.f32 %v249, %v281
        %v313 = vadd.f32 %v241, %v285
        %v314 = vadd.f32 %v200, %v287
        %v315 = vadd.f32 %v250, %v286
        %v316 = vadd.f32 %v242, %v290
        %v317 = vadd.f32 %v203, %v292
        %v318 = vadd.f32 %v251, %v291
        %v319 = vadd.f32 %v243, %v295
        %v320 = vadd.f32 %v206, %v297
        %v321 = vadd.f32 %v252, %v296
        %vm330 = vcmask 1045504
        %v331 = vrot.slane %v240, 2
        %v332 = vrot.slane %v197, 2
        %v333 = vsel %vm330, %v331, %v332
        %v334 = vrot.slane %v249, 2
        %v335 = vsel %vm330, %v332, %v334
        %v336 = vrot.slane %v241, 2
        %v337 = vrot.slane %v200, 2
        %v338 = vsel %vm330, %v336, %v337
        %v339 = vrot.slane %v250, 2
        %v340 = vsel %vm330, %v337, %v339
        %v341 = vrot.slane %v242, 2
        %v342 = vrot.slane %v203, 2
        %v343 = vsel %vm330, %v341, %v342
        %v344 = vrot.slane %v251, 2
        %v345 = vsel %vm330, %v342, %v344
        %v346 = vrot.slane %v243, 2
        %v347 = vrot.slane %v206, 2
        %v348 = vsel %vm330, %v346, %v347
        %v349 = vrot.slane %v252, 2
        %v350 = vsel %vm330, %v347, %v349
        %v363 = vadd.f32 %v310, %v333
        %v364 = vadd.f32 %v311, %v335
        %v365 = vadd.f32 %v312, %v334
        %v366 = vadd.f32 %v313, %v338
        %v367 = vadd.f32 %v314, %v340
        %v368 = vadd.f32 %v315, %v339
        %v369 = vadd.f32 %v316, %v343
        %v370 = vadd.f32 %v317, %v345
        %v371 = vadd.f32 %v318, %v344
        %v372 = vadd.f32 %v319, %v348
        %v373 = vadd.f32 %v320, %v350
        %v374 = vadd.f32 %v321, %v349
        %v375 = vmul.f32 %v363, 0.25
        %v376 = vmul.f32 %v364, 0.25
        %v377 = vmul.f32 %v365, 0.25
        %v378 = vmul.f32 %v366, 0.25
        %v379 = vmul.f32 %v367, 0.25
        %v380 = vmul.f32 %v368, 0.25
        %v381 = vmul.f32 %v369, 0.25
        %v382 = vmul.f32 %v370, 0.25
        %v383 = vmul.f32 %v371, 0.25
        %v384 = vmul.f32 %v372, 0.25
        %v385 = vmul.f32 %v373, 0.25
        %v386 = vmul.f32 %v374, 0.25
        %399 = vrot.lane.b32.xlu0 %v375, 126
        %v400 = vpop.permute.xlu0 %399
        %401 = vrot.lane.b32.xlu0 %v376, 126
        %v402 = vpop.permute.xlu0 %401
        %403 = vrot.lane.b32.xlu0 %v377, 126
        %v404 = vpop.permute.xlu0 %403
        %405 = vrot.lane.b32.xlu0 %v378, 126
        %v406 = vpop.permute.xlu0 %405
        %407 = vrot.lane.b32.xlu0 %v379, 126
        %v408 = vpop.permute.xlu0 %407
        %409 = vrot.lane.b32.xlu0 %v380, 126
        %v410 = vpop.permute.xlu0 %409
        %411 = vrot.lane.b32.xlu0 %v381, 126
        %v412 = vpop.permute.xlu0 %411
        %413 = vrot.lane.b32.xlu0 %v382, 126
        %v414 = vpop.permute.xlu0 %413
        %415 = vrot.lane.b32.xlu0 %v383, 126
        %v416 = vpop.permute.xlu0 %415
        %417 = vrot.lane.b32.xlu0 %v384, 126
        %v418 = vpop.permute.xlu0 %417
        %419 = vrot.lane.b32.xlu0 %v385, 126
        %v420 = vpop.permute.xlu0 %419
        %421 = vrot.lane.b32.xlu0 %v386, 126
        %v422 = vpop.permute.xlu0 %421
        %435 = vrot.lane.b32.xlu0 %v375, 2
        %v436 = vpop.permute.xlu0 %435
        %437 = vrot.lane.b32.xlu0 %v376, 2
        %v438 = vpop.permute.xlu0 %437
        %439 = vrot.lane.b32.xlu0 %v377, 2
        %v440 = vpop.permute.xlu0 %439
        %441 = vrot.lane.b32.xlu0 %v378, 2
        %v442 = vpop.permute.xlu0 %441
        %443 = vrot.lane.b32.xlu0 %v379, 2
        %v444 = vpop.permute.xlu0 %443
        %445 = vrot.lane.b32.xlu0 %v380, 2
        %v446 = vpop.permute.xlu0 %445
        %447 = vrot.lane.b32.xlu0 %v381, 2
        %v448 = vpop.permute.xlu0 %447
        %449 = vrot.lane.b32.xlu0 %v382, 2
        %v450 = vpop.permute.xlu0 %449
        %451 = vrot.lane.b32.xlu0 %v383, 2
        %v452 = vpop.permute.xlu0 %451
        %453 = vrot.lane.b32.xlu0 %v384, 2
        %v454 = vpop.permute.xlu0 %453
        %455 = vrot.lane.b32.xlu0 %v385, 2
        %v456 = vpop.permute.xlu0 %455
        %457 = vrot.lane.b32.xlu0 %v386, 2
        %v458 = vpop.permute.xlu0 %457
        %471 = vrot.lane.b32.xlu0 %v375, 4
        %v472 = vpop.permute.xlu0 %471
        %473 = vrot.lane.b32.xlu0 %v376, 4
        %v474 = vpop.permute.xlu0 %473
        %475 = vrot.lane.b32.xlu0 %v377, 4
        %v476 = vpop.permute.xlu0 %475
        %477 = vrot.lane.b32.xlu0 %v378, 4
        %v478 = vpop.permute.xlu0 %477
        %479 = vrot.lane.b32.xlu0 %v379, 4
        %v480 = vpop.permute.xlu0 %479
        %481 = vrot.lane.b32.xlu0 %v380, 4
        %v482 = vpop.permute.xlu0 %481
        %483 = vrot.lane.b32.xlu0 %v381, 4
        %v484 = vpop.permute.xlu0 %483
        %485 = vrot.lane.b32.xlu0 %v382, 4
        %v486 = vpop.permute.xlu0 %485
        %487 = vrot.lane.b32.xlu0 %v383, 4
        %v488 = vpop.permute.xlu0 %487
        %489 = vrot.lane.b32.xlu0 %v384, 4
        %v490 = vpop.permute.xlu0 %489
        %491 = vrot.lane.b32.xlu0 %v385, 4
        %v492 = vpop.permute.xlu0 %491
        %493 = vrot.lane.b32.xlu0 %v386, 4
        %v494 = vpop.permute.xlu0 %493
        %507 = vrot.lane.b32.xlu0 %v375, 6
        %v508 = vpop.permute.xlu0 %507
        %509 = vrot.lane.b32.xlu0 %v376, 6
        %v510 = vpop.permute.xlu0 %509
        %511 = vrot.lane.b32.xlu0 %v377, 6
        %v512 = vpop.permute.xlu0 %511
        %513 = vrot.lane.b32.xlu0 %v378, 6
        %v514 = vpop.permute.xlu0 %513
        %515 = vrot.lane.b32.xlu0 %v379, 6
        %v516 = vpop.permute.xlu0 %515
        %517 = vrot.lane.b32.xlu0 %v380, 6
        %v518 = vpop.permute.xlu0 %517
        %519 = vrot.lane.b32.xlu0 %v381, 6
        %v520 = vpop.permute.xlu0 %519
        %521 = vrot.lane.b32.xlu0 %v382, 6
        %v522 = vpop.permute.xlu0 %521
        %523 = vrot.lane.b32.xlu0 %v383, 6
        %v524 = vpop.permute.xlu0 %523
        %525 = vrot.lane.b32.xlu0 %v384, 6
        %v526 = vpop.permute.xlu0 %525
        %527 = vrot.lane.b32.xlu0 %v385, 6
        %v528 = vpop.permute.xlu0 %527
        %529 = vrot.lane.b32.xlu0 %v386, 6
        %v530 = vpop.permute.xlu0 %529
        %vm543 = vcmask 7168
        %v544 = vsel %vm543, %v400, %v375
        %v545 = vsel %vm543, %v402, %v376
        %v546 = vsel %vm543, %v404, %v377
        %v547 = vsel %vm543, %v406, %v378
        %v548 = vsel %vm543, %v408, %v379
        %v549 = vsel %vm543, %v410, %v380
        %v550 = vsel %vm543, %v412, %v381
        %v551 = vsel %vm543, %v414, %v382
        %v552 = vsel %vm543, %v416, %v383
        %v553 = vsel %vm543, %v418, %v384
        %v554 = vsel %vm543, %v420, %v385
        %v555 = vsel %vm543, %v422, %v386
        %vm556 = vcmask 15360
        %v557 = vsel %vm556, %v544, %v436
        %v558 = vsel %vm556, %v545, %v438
        %v559 = vsel %vm556, %v546, %v440
        %v560 = vsel %vm556, %v547, %v442
        %v561 = vsel %vm556, %v548, %v444
        %v562 = vsel %vm556, %v549, %v446
        %v563 = vsel %vm556, %v550, %v448
        %v564 = vsel %vm556, %v551, %v450
        %v565 = vsel %vm556, %v552, %v452
        %v566 = vsel %vm556, %v553, %v454
        %v567 = vsel %vm556, %v554, %v456
        %v568 = vsel %vm556, %v555, %v458
        %vm569 = vcmask 146432
        %v570 = vsel %vm569, %v557, %v472
        %v571 = vsel %vm569, %v558, %v474
        %v572 = vsel %vm569, %v559, %v476
        %v573 = vsel %vm569, %v560, %v478
        %v574 = vsel %vm569, %v561, %v480
        %v575 = vsel %vm569, %v562, %v482
        %v576 = vsel %vm569, %v563, %v484
        %v577 = vsel %vm569, %v564, %v486
        %v578 = vsel %vm569, %v565, %v488
        %v579 = vsel %vm569, %v566, %v490
        %v580 = vsel %vm569, %v567, %v492
        %v581 = vsel %vm569, %v568, %v494
        %vm582 = vcmask 154624
        %v583 = vsel %vm582, %v570, %v508
        %v584 = vsel %vm582, %v571, %v510
        %v585 = vsel %vm582, %v572, %v512
        %v586 = vsel %vm582, %v573, %v514
        %v587 = vsel %vm582, %v574, %v516
        %v588 = vsel %vm582, %v575, %v518
        %v589 = vsel %vm582, %v576, %v520
        %v590 = vsel %vm582, %v577, %v522
        %v591 = vsel %vm582, %v578, %v524
        %v592 = vsel %vm582, %v579, %v526
        %v593 = vsel %vm582, %v580, %v528
        %v594 = vsel %vm582, %v581, %v530
        %v595 = vmul.f32 %v583, 2.0
        %v596 = vmul.f32 %v584, 2.0
        %v597 = vmul.f32 %v585, 2.0
        %v598 = vmul.f32 %v586, 2.0
        %v599 = vmul.f32 %v587, 2.0
        %v600 = vmul.f32 %v588, 2.0
        %v601 = vmul.f32 %v589, 2.0
        %v602 = vmul.f32 %v590, 2.0
        %v603 = vmul.f32 %v591, 2.0
        %v604 = vmul.f32 %v592, 2.0
        %v605 = vmul.f32 %v593, 2.0
        %v606 = vmul.f32 %v594, 2.0
        %619 = vrot.lane.b32.xlu0 %v595, 127
        %v620 = vpop.permute.xlu0 %619
        %621 = vrot.lane.b32.xlu0 %v596, 127
        %v622 = vpop.permute.xlu0 %621
        %623 = vrot.lane.b32.xlu0 %v597, 127
        %v624 = vpop.permute.xlu0 %623
        %625 = vrot.lane.b32.xlu0 %v598, 127
        %v626 = vpop.permute.xlu0 %625
        %627 = vrot.lane.b32.xlu0 %v599, 127
        %v628 = vpop.permute.xlu0 %627
        %629 = vrot.lane.b32.xlu0 %v600, 127
        %v630 = vpop.permute.xlu0 %629
        %631 = vrot.lane.b32.xlu0 %v601, 127
        %v632 = vpop.permute.xlu0 %631
        %633 = vrot.lane.b32.xlu0 %v602, 127
        %v634 = vpop.permute.xlu0 %633
        %635 = vrot.lane.b32.xlu0 %v603, 127
        %v636 = vpop.permute.xlu0 %635
        %637 = vrot.lane.b32.xlu0 %v604, 127
        %v638 = vpop.permute.xlu0 %637
        %639 = vrot.lane.b32.xlu0 %v605, 127
        %v640 = vpop.permute.xlu0 %639
        %641 = vrot.lane.b32.xlu0 %v606, 127
        %v642 = vpop.permute.xlu0 %641
        %v655 = vadd.f32 %v583, %v620
        %v656 = vadd.f32 %v584, %v622
        %v657 = vadd.f32 %v585, %v624
        %v658 = vadd.f32 %v586, %v626
        %v659 = vadd.f32 %v587, %v628
        %v660 = vadd.f32 %v588, %v630
        %v661 = vadd.f32 %v589, %v632
        %v662 = vadd.f32 %v590, %v634
        %v663 = vadd.f32 %v591, %v636
        %v664 = vadd.f32 %v592, %v638
        %v665 = vadd.f32 %v593, %v640
        %v666 = vadd.f32 %v594, %v642
        %679 = vrot.lane.b32.xlu0 %v583, 126
        %v680 = vpop.permute.xlu0 %679
        %681 = vrot.lane.b32.xlu0 %v584, 126
        %v682 = vpop.permute.xlu0 %681
        %683 = vrot.lane.b32.xlu0 %v585, 126
        %v684 = vpop.permute.xlu0 %683
        %685 = vrot.lane.b32.xlu0 %v586, 126
        %v686 = vpop.permute.xlu0 %685
        %687 = vrot.lane.b32.xlu0 %v587, 126
        %v688 = vpop.permute.xlu0 %687
        %689 = vrot.lane.b32.xlu0 %v588, 126
        %v690 = vpop.permute.xlu0 %689
        %691 = vrot.lane.b32.xlu0 %v589, 126
        %v692 = vpop.permute.xlu0 %691
        %693 = vrot.lane.b32.xlu0 %v590, 126
        %v694 = vpop.permute.xlu0 %693
        %695 = vrot.lane.b32.xlu0 %v591, 126
        %v696 = vpop.permute.xlu0 %695
        %697 = vrot.lane.b32.xlu0 %v592, 126
        %v698 = vpop.permute.xlu0 %697
        %699 = vrot.lane.b32.xlu0 %v593, 126
        %v700 = vpop.permute.xlu0 %699
        %701 = vrot.lane.b32.xlu0 %v594, 126
        %v702 = vpop.permute.xlu0 %701
        %v715 = vadd.f32 %v655, %v680
        %v716 = vadd.f32 %v656, %v682
        %v717 = vadd.f32 %v657, %v684
        %v718 = vadd.f32 %v658, %v686
        %v719 = vadd.f32 %v659, %v688
        %v720 = vadd.f32 %v660, %v690
        %v721 = vadd.f32 %v661, %v692
        %v722 = vadd.f32 %v662, %v694
        %v723 = vadd.f32 %v663, %v696
        %v724 = vadd.f32 %v664, %v698
        %v725 = vadd.f32 %v665, %v700
        %v726 = vadd.f32 %v666, %v702
        %v727 = vmul.f32 %v715, 0.25
        %v728 = vmul.f32 %v716, 0.25
        %v729 = vmul.f32 %v717, 0.25
        %v730 = vmul.f32 %v718, 0.25
        %v731 = vmul.f32 %v719, 0.25
        %v732 = vmul.f32 %v720, 0.25
        %v733 = vmul.f32 %v721, 0.25
        %v734 = vmul.f32 %v722, 0.25
        %v735 = vmul.f32 %v723, 0.25
        %v736 = vmul.f32 %v724, 0.25
        %v737 = vmul.f32 %v725, 0.25
        %v738 = vmul.f32 %v726, 0.25
        %v739 = vadd.f32 %v727, 0.5
        %v740 = vadd.f32 %v728, 0.5
        %v741 = vadd.f32 %v729, 0.5
        %v742 = vadd.f32 %v730, 0.5
        %v743 = vadd.f32 %v731, 0.5
        %v744 = vadd.f32 %v732, 0.5
        %v745 = vadd.f32 %v733, 0.5
        %v746 = vadd.f32 %v734, 0.5
        %v747 = vadd.f32 %v735, 0.5
        %v748 = vadd.f32 %v736, 0.5
        %v749 = vadd.f32 %v737, 0.5
        %v750 = vadd.f32 %v738, 0.5
        %v751 = vfloor.f32 %v739
        %v752 = vfloor.f32 %v740
        %v753 = vfloor.f32 %v741
        %v754 = vfloor.f32 %v742
        %v755 = vfloor.f32 %v743
        %v756 = vfloor.f32 %v744
        %v757 = vfloor.f32 %v745
        %v758 = vfloor.f32 %v746
        %v759 = vfloor.f32 %v747
        %v760 = vfloor.f32 %v748
        %v761 = vfloor.f32 %v749
        %v762 = vfloor.f32 %v750
        %771 = vrot.lane.b32.xlu0 %v751, 126
        %v772 = vpop.permute.xlu0 %771
        %773 = vrot.lane.b32.xlu0 %v752, 126
        %v774 = vpop.permute.xlu0 %773
        %775 = vrot.lane.b32.xlu0 %v754, 126
        %v776 = vpop.permute.xlu0 %775
        %777 = vrot.lane.b32.xlu0 %v755, 126
        %v778 = vpop.permute.xlu0 %777
        %779 = vrot.lane.b32.xlu0 %v757, 126
        %v780 = vpop.permute.xlu0 %779
        %781 = vrot.lane.b32.xlu0 %v758, 126
        %v782 = vpop.permute.xlu0 %781
        %783 = vrot.lane.b32.xlu0 %v760, 126
        %v784 = vpop.permute.xlu0 %783
        %785 = vrot.lane.b32.xlu0 %v761, 126
        %v786 = vpop.permute.xlu0 %785
        %v795 = vadd.f32 %v751, %v772
        %v796 = vadd.f32 %v752, %v774
        %v797 = vadd.f32 %v754, %v776
        %v798 = vadd.f32 %v755, %v778
        %v799 = vadd.f32 %v757, %v780
        %v800 = vadd.f32 %v758, %v782
        %v801 = vadd.f32 %v760, %v784
        %v802 = vadd.f32 %v761, %v786
        %v807 = vrot.slane %v751, 2
        %v808 = vrot.slane %v752, 2
        %v809 = vsel %vm330, %v807, %v808
        %v810 = vrot.slane %v753, 2
        %v811 = vsel %vm330, %v808, %v810
        %v812 = vrot.slane %v754, 2
        %v813 = vrot.slane %v755, 2
        %v814 = vsel %vm330, %v812, %v813
        %v815 = vrot.slane %v756, 2
        %v816 = vsel %vm330, %v813, %v815
        %v817 = vrot.slane %v757, 2
        %v818 = vrot.slane %v758, 2
        %v819 = vsel %vm330, %v817, %v818
        %v820 = vrot.slane %v759, 2
        %v821 = vsel %vm330, %v818, %v820
        %v822 = vrot.slane %v760, 2
        %v823 = vrot.slane %v761, 2
        %v824 = vsel %vm330, %v822, %v823
        %v825 = vrot.slane %v762, 2
        %v826 = vsel %vm330, %v823, %v825
        %v835 = vadd.f32 %v795, %v809
        %v836 = vadd.f32 %v796, %v811
        %v837 = vadd.f32 %v797, %v814
        %v838 = vadd.f32 %v798, %v816
        %v839 = vadd.f32 %v799, %v819
        %v840 = vadd.f32 %v800, %v821
        %v841 = vadd.f32 %v801, %v824
        %v842 = vadd.f32 %v802, %v826
        %843 = vrot.lane.b32.xlu0 %v809, 126
        %v844 = vpop.permute.xlu0 %843
        %845 = vrot.lane.b32.xlu0 %v811, 126
        %v846 = vpop.permute.xlu0 %845
        %847 = vrot.lane.b32.xlu0 %v814, 126
        %v848 = vpop.permute.xlu0 %847
        %849 = vrot.lane.b32.xlu0 %v816, 126
        %v850 = vpop.permute.xlu0 %849
        %851 = vrot.lane.b32.xlu0 %v819, 126
        %v852 = vpop.permute.xlu0 %851
        %853 = vrot.lane.b32.xlu0 %v821, 126
        %v854 = vpop.permute.xlu0 %853
        %855 = vrot.lane.b32.xlu0 %v824, 126
        %v856 = vpop.permute.xlu0 %855
        %857 = vrot.lane.b32.xlu0 %v826, 126
        %v858 = vpop.permute.xlu0 %857
        %v867 = vadd.f32 %v835, %v844
        %v868 = vadd.f32 %v836, %v846
        %v869 = vadd.f32 %v837, %v848
        %v870 = vadd.f32 %v838, %v850
        %v871 = vadd.f32 %v839, %v852
        %v872 = vadd.f32 %v840, %v854
        %v873 = vadd.f32 %v841, %v856
        %v874 = vadd.f32 %v842, %v858
        %v875 = vmul.f32 %v867, 2.0
        %v876 = vmul.f32 %v868, 2.0
        %v877 = vmul.f32 %v869, 2.0
        %v878 = vmul.f32 %v870, 2.0
        %v879 = vmul.f32 %v871, 2.0
        %v880 = vmul.f32 %v872, 2.0
        %v881 = vmul.f32 %v873, 2.0
        %v882 = vmul.f32 %v874, 2.0
        %v883 = vmul.f32 %v751, 8.0
        %v884 = vmul.f32 %v752, 8.0
        %v885 = vmul.f32 %v753, 8.0
        %v886 = vmul.f32 %v754, 8.0
        %v887 = vmul.f32 %v755, 8.0
        %v888 = vmul.f32 %v756, 8.0
        %v889 = vmul.f32 %v757, 8.0
        %v890 = vmul.f32 %v758, 8.0
        %v891 = vmul.f32 %v759, 8.0
        %v892 = vmul.f32 %v760, 8.0
        %v893 = vmul.f32 %v761, 8.0
        %v894 = vmul.f32 %v762, 8.0
        %v907 = vrot.slane %v883, 1
        %v908 = vrot.slane %v884, 1
        %v909 = vsel %vm277, %v907, %v908
        %v910 = vrot.slane %v885, 1
        %v911 = vsel %vm277, %v908, %v910
        %v912 = vrot.slane %v886, 1
        %v913 = vrot.slane %v887, 1
        %v914 = vsel %vm277, %v912, %v913
        %v915 = vrot.slane %v888, 1
        %v916 = vsel %vm277, %v913, %v915
        %v917 = vrot.slane %v889, 1
        %v918 = vrot.slane %v890, 1
        %v919 = vsel %vm277, %v917, %v918
        %v920 = vrot.slane %v891, 1
        %v921 = vsel %vm277, %v918, %v920
        %v922 = vrot.slane %v892, 1
        %v923 = vrot.slane %v893, 1
        %v924 = vsel %vm277, %v922, %v923
        %v925 = vrot.slane %v894, 1
        %v926 = vsel %vm277, %v923, %v925
        %927 = vrot.lane.b32.xlu0 %v909, 127
        %v928 = vpop.permute.xlu0 %927
        %929 = vrot.lane.b32.xlu0 %v911, 127
        %v930 = vpop.permute.xlu0 %929
        %931 = vrot.lane.b32.xlu0 %v914, 127
        %v932 = vpop.permute.xlu0 %931
        %933 = vrot.lane.b32.xlu0 %v916, 127
        %v934 = vpop.permute.xlu0 %933
        %935 = vrot.lane.b32.xlu0 %v919, 127
        %v936 = vpop.permute.xlu0 %935
        %937 = vrot.lane.b32.xlu0 %v921, 127
        %v938 = vpop.permute.xlu0 %937
        %939 = vrot.lane.b32.xlu0 %v924, 127
        %v940 = vpop.permute.xlu0 %939
        %941 = vrot.lane.b32.xlu0 %v926, 127
        %v942 = vpop.permute.xlu0 %941
        %v951 = vsub.f32 %v875, %v928
        %v952 = vsub.f32 %v876, %v930
        %v953 = vsub.f32 %v877, %v932
        %v954 = vsub.f32 %v878, %v934
        %v955 = vsub.f32 %v879, %v936
        %v956 = vsub.f32 %v880, %v938
        %v957 = vsub.f32 %v881, %v940
        %v958 = vsub.f32 %v882, %v942
        %v959 = vand.u32 2147483647, %v951
        %v960 = vand.u32 2147483647, %v952
        %v961 = vand.u32 2147483647, %v953
        %v962 = vand.u32 2147483647, %v954
        %v963 = vand.u32 2147483647, %v955
        %v964 = vand.u32 2147483647, %v956
        %v965 = vand.u32 2147483647, %v957
        %v966 = vand.u32 2147483647, %v958
        %v967 = vmin.f32 %v959, 255.0
        %v968 = vmin.f32 %v960, 255.0
        %v969 = vmin.f32 %v961, 255.0
        %v970 = vmin.f32 %v962, 255.0
        %v971 = vmin.f32 %v963, 255.0
        %v972 = vmin.f32 %v964, 255.0
        %v973 = vmin.f32 %v965, 255.0
        %v974 = vmin.f32 %v966, 255.0
        %v975 = vcvt.f32.s32.to.zero.pseudo %v967
        %v976 = vcvt.f32.s32.to.zero.pseudo %v968
        %v977 = vcvt.f32.s32.to.zero.pseudo %v969
        %v978 = vcvt.f32.s32.to.zero.pseudo %v970
        %v979 = vcvt.f32.s32.to.zero.pseudo %v971
        %v980 = vcvt.f32.s32.to.zero.pseudo %v972
        %v981 = vcvt.f32.s32.to.zero.pseudo %v973
        %v982 = vcvt.f32.s32.to.zero.pseudo %v974
        %v983 = vpack.c.b16 %v975, %v975
        %v984 = vpack.c.b8 %v983, %v983
        %v985 = vpack.c.b16 %v976, %v976
        %v986 = vpack.c.b8 %v985, %v985
        %v987 = vpack.c.b16 %v977, %v977
        %v988 = vpack.c.b8 %v987, %v987
        %v989 = vpack.c.b16 %v978, %v978
        %v990 = vpack.c.b8 %v989, %v989
        %v991 = vpack.c.b16 %v979, %v979
        %v992 = vpack.c.b8 %v991, %v991
        %v993 = vpack.c.b16 %v980, %v980
        %v994 = vpack.c.b8 %v993, %v993
        %v995 = vpack.c.b16 %v981, %v981
        %v996 = vpack.c.b8 %v995, %v995
        %v997 = vpack.c.b16 %v982, %v982
        %v998 = vpack.c.b8 %v997, %v997
        %vm999 = vcmask 123904
        %1000 = vst.msk [vmem:[%s135] sm:$0x3] %vm999, %v984
        %1001 = vst.msk [vmem:[%s135 + $0x2] sm:$0x3] %vm999, %v986
        %1002 = vst.msk [vmem:[%s135 + $0x4] sm:$0x3] %vm999, %v988
        %1003 = vst.msk [vmem:[%s135 + $0x6] sm:$0x3] %vm999, %v990
        %1004 = vst.msk [vmem:[%s135 + $0x8] sm:$0x3] %vm999, %v992
        %1005 = vst.msk [vmem:[%s135 + $0xa] sm:$0x3] %vm999, %v994
        %1006 = vst.msk [vmem:[%s135 + $0xc] sm:$0x3] %vm999, %v996
        %1007 = vst.msk [vmem:[%s135 + $0xe] sm:$0x3] %vm999, %v998
        %s1008 = sand.u32 %s52, 1
        %s1009 = scalar_lea.sflag [#allocation4], %s1008
        %s1010 = sand.u32 %s52, 1
        %s1011 = smul.addr %s1010, 16
        %s1012 = scalar_lea.vmem [#allocation5], %s1011
        // Predicated region
        $region29: #{tpu_custom_call.1} parent=23 // pred_check
          %p1013 = pneg %p62
        $region30: #{tpu_custom_call.1} parent=23 // pred_check_branch
          %1015 = sbr.rel (%p1013) target = $region32
        $region31: #{tpu_custom_call.1} parent=23 // pred_region
          %s1016 = smul.u32 4, %s18
          %s1018 = ssub.s32 256, 256
          %1019 = vsyncadd %s1009, %s1018
          %s1020 = smul.addr %s1016, 2
          %s1021 = smul.addr %s1020, 32
          %s1022 = scalar_lea.hbm %s1, %s1021
          %s1023 = sshll.u32 %s1012, 4
          %s1024 = int_to_ptr.vmem [resolvable:$true] %s1023
          %1029 = dma.vmem_to_hbm [thread:$0]  %s1024, 256, %s1022, %s1009, 32, 32, 2
        $region32: #{tpu_custom_call.1} parent=23 // pred_fallthru
          _
      $region24: #{tpu_custom_call.1} parent=5 // pred_fallthru
        _
      %p1030 = scmp.le.s32.totalorder 2, %s13
      // Predicated region
      $region33: #{tpu_custom_call.1} parent=5 // pred_check
        %p1031 = pneg %p1030
      $region34: #{tpu_custom_call.1} parent=5 // pred_check_branch
        %1033 = sbr.rel (%p1031) target = $region36
      $region35: #{tpu_custom_call.1} parent=5 // pred_region
        %s1034 = ssub.s32 %s13, 2
        // Predicated region
        $region37: #{tpu_custom_call.1} parent=35 // pred_check
          %p1035 = pneg %p68
        $region38: #{tpu_custom_call.1} parent=35 // pred_check_branch
          %1037 = sbr.rel (%p1035) target = $region40
        $region39: #{tpu_custom_call.1} parent=35 // pred_region
          %s1038 = sand.u32 %s53, 1
          %s1039 = scalar_lea.sflag [#allocation4], %s1038
          %s1040 = sand.u32 %s53, 1
          %s1041 = smul.addr %s1040, 16
          %s1042 = scalar_lea.vmem [#allocation5], %s1041
          %1043 = dma.done %s1039, 256
        $region40: #{tpu_custom_call.1} parent=35 // pred_fallthru
          _
      $region36: #{tpu_custom_call.1} parent=5 // pred_fallthru
        _
    $region6: #{tpu_custom_call.1} parent=1 // loop_footer
      %s17 = sadd.s32 1, %s13
    $region7: #{tpu_custom_call.1} parent=1 // loop_footer_branch
      %12 = sbr.rel target = $region3
    $region8: #{tpu_custom_call.1} parent=1 // loop_exit
      _
    %1044 = vsyncpa [#allocation3], 1
    %s1045 = scalar_lea.sflag [#allocation3], 1
    %1046 = vsyncpa %s1045, 1
    %1047 = vsyncpa [#allocation4], 1
    %s1048 = scalar_lea.sflag [#allocation4], 1
    %1049 = vsyncpa %s1048, 1

</llo_original>
